<compile_context>
chip_gen: v5e
topology: v5e:2x2
jax: 0.10.0
libtpu: 0.0.40
codegen_flags: <defaults>
</compile_context>

<pallas_src>
import functools
import math

import jax
import jax.numpy as jnp
from jax.experimental import pallas as pl
from jax.experimental.pallas import tpu as pltpu

NEG_INF = -1e30


# ----------------------------------------------------------------------------
# Tiled linear projection kernel (M-parallel; K/N kept whole — they are small)
# ----------------------------------------------------------------------------
def _linear_kernel(x_ref, w_ref, o_ref):
    o_ref[...] = jnp.dot(
        x_ref[...], w_ref[...], preferred_element_type=jnp.float32
    ).astype(o_ref.dtype)


def pallas_linear(x2d, w):
    """x2d: (M, K) @ w: (K, N) -> (M, N)."""
    M, K = x2d.shape
    K2, N = w.shape
    assert K == K2
    if M % 256 == 0:
        tm = 256
    elif M % 128 == 0:
        tm = 128
    else:
        tm = M
    return pl.pallas_call(
        _linear_kernel,
        out_shape=jax.ShapeDtypeStruct((M, N), x2d.dtype),
        grid=(M // tm,),
        in_specs=[
            pl.BlockSpec((tm, K), lambda i: (i, 0)),
            pl.BlockSpec((K, N), lambda i: (0, 0)),
        ],
        out_specs=pl.BlockSpec((tm, N), lambda i: (i, 0)),
        compiler_params=pltpu.CompilerParams(
            dimension_semantics=("parallel",)
        ),
    )(x2d, w)


# ----------------------------------------------------------------------------
# Causal flash attention kernel, heads fused into each block
#   q/k/v: (B, H, N, D); blocks (1, H, tq, D); grid (B, N//tq, N//tk)
# ----------------------------------------------------------------------------
def _flash_attn_kernel(q_ref, k_ref, v_ref, o_ref, m_sc, l_sc, acc_sc,
                       *, sm_scale, tq, tk):
    qi = pl.program_id(1)
    ki = pl.program_id(2)

    @pl.when(ki == 0)
    def _():
        m_sc[...] = jnp.full_like(m_sc, NEG_INF)
        l_sc[...] = jnp.zeros_like(l_sc)
        acc_sc[...] = jnp.zeros_like(acc_sc)

    def update(apply_mask):
        # Fold softmax scale into q once (tq*D mults instead of tq*tk),
        # cast MXU inputs to bf16, accumulate in f32.
        q = (q_ref[0] * sm_scale).astype(jnp.bfloat16)   # (H, tq, D)
        k = k_ref[0].astype(jnp.bfloat16)                # (H, tk, D)
        v = v_ref[0].astype(jnp.bfloat16)                # (H, tk, D)

        # Batched MXU matmul over the head axis; contraction on last dims
        # (no explicit transpose of k).
        s = jnp.einsum("hqd,hkd->hqk", q, k,
                       preferred_element_type=jnp.float32)   # (H, tq, tk)

        if apply_mask:  # only the diagonal block needs the causal mask
            h = s.shape[0]
            q_pos = qi * tq + jax.lax.broadcasted_iota(jnp.int32, (h, tq, tk), 1)
            k_pos = ki * tk + jax.lax.broadcasted_iota(jnp.int32, (h, tq, tk), 2)
            s = jnp.where(k_pos <= q_pos, s, NEG_INF)

        m_prev = m_sc[...]                                            # (H, tq, 1)
        m_new = jnp.maximum(m_prev, s.max(axis=-1, keepdims=True))    # (H, tq, 1)
        alpha = jnp.exp(m_prev - m_new)
        p = jnp.exp(s - m_new)                                        # (H, tq, tk)

        l_sc[...] = alpha * l_sc[...] + p.sum(axis=-1, keepdims=True)
        acc_sc[...] = alpha * acc_sc[...] + jnp.einsum(
            "hqk,hkd->hqd", p.astype(jnp.bfloat16), v,
            preferred_element_type=jnp.float32)
        m_sc[...] = m_new

    # Causal block skipping (requires tq == tk): blocks with ki > qi are fully
    # masked and contribute nothing -> skip their compute entirely.  ki == 0 is
    # never skipped, so the running max is never NEG_INF at finalize time.
    @pl.when(ki < qi)
    def _():
        update(apply_mask=False)   # fully below the diagonal: no mask needed

    @pl.when(ki == qi)
    def _():
        update(apply_mask=True)    # diagonal block: per-element causal mask

    @pl.when(ki == pl.num_programs(2) - 1)
    def _():
        inv_l = pl.reciprocal(l_sc[...], approx=True)   # EUP slot, ~free
        o_ref[0] = (acc_sc[...] * inv_l).astype(o_ref.dtype)


def pallas_causal_attention(q, k, v, *, sm_scale, block_q=128, block_k=128):
    """q, k, v: (B, H, N, D) float32 -> (B, H, N, D)."""
    B, H, N, D = q.shape
    tq = min(block_q, N)
    tk = min(block_k, N)
    assert tq == tk, "block skipping logic assumes tq == tk"
    assert N % tq == 0

    grid = (B, N // tq, N // tk)
    kernel = functools.partial(_flash_attn_kernel, sm_scale=sm_scale, tq=tq, tk=tk)
    return pl.pallas_call(
        kernel,
        out_shape=jax.ShapeDtypeStruct((B, H, N, D), q.dtype),
        grid_spec=pltpu.PrefetchScalarGridSpec(
            num_scalar_prefetch=0,
            grid=grid,
            in_specs=[
                pl.BlockSpec((1, H, tq, D), lambda b, qi, ki: (b, 0, qi, 0)),
                pl.BlockSpec((1, H, tk, D), lambda b, qi, ki: (b, 0, ki, 0)),
                pl.BlockSpec((1, H, tk, D), lambda b, qi, ki: (b, 0, ki, 0)),
            ],
            out_specs=pl.BlockSpec((1, H, tq, D), lambda b, qi, ki: (b, 0, qi, 0)),
            scratch_shapes=[
                pltpu.VMEM((H, tq, 1), jnp.float32),   # m (running max)
                pltpu.VMEM((H, tq, 1), jnp.float32),   # l (running denom)
                pltpu.VMEM((H, tq, D), jnp.float32),   # acc
            ],
        ),
        compiler_params=pltpu.CompilerParams(
            dimension_semantics=("parallel", "parallel", "arbitrary"),
            vmem_limit_bytes=32 * 1024 * 1024,
        ),
    )(q, k, v)


# ----------------------------------------------------------------------------
# Lrpe (lrpe_type=1) == rotary embedding, rotate_half convention
# ----------------------------------------------------------------------------
def rope(x, base=10000.0, offset=0):
    # x: (B, N, H, D)
    b, n, h, d = x.shape
    half = d // 2
    theta = base ** (-2.0 * jnp.arange(half, dtype=jnp.float32) / d)   # (half,)
    pos = offset + jnp.arange(n, dtype=jnp.float32)                    # (n,)
    ang = pos[:, None] * theta[None, :]                                # (n, half)
    cos = jnp.cos(ang)[None, :, None, :]                               # (1,n,1,half)
    sin = jnp.sin(ang)[None, :, None, :]
    x1, x2 = x[..., :half], x[..., half:]
    return jnp.concatenate([x1 * cos - x2 * sin, x2 * cos + x1 * sin], axis=-1)


# ----------------------------------------------------------------------------
# Full forward (Pallas kernels for projections + attention; glue in JAX)
# ----------------------------------------------------------------------------
def naive_sparse_attention_forward(x, params, *, num_heads, head_dim,
                                   compute_gates=False):
    b, n, e = x.shape
    x2d = x.reshape(b * n, e)

    q = pallas_linear(x2d, params["wq"]).reshape(b, n, num_heads, head_dim)
    k = pallas_linear(x2d, params["wk"]).reshape(b, n, num_heads, head_dim)
    v = pallas_linear(x2d, params["wv"]).reshape(b, n, num_heads, head_dim)

    if compute_gates:
        # Matches the torch forward, but the dense flash-attention branch never
        # consumes the gates; off by default to avoid a dead HBM pass.
        g = pallas_linear(x2d, params["wg"]).reshape(b, n, 3 * num_heads)
        g_cmp, g_slc, g_swa = jnp.split(jax.nn.sigmoid(g), 3, axis=-1)
        del g_cmp, g_slc, g_swa

    # Lrpe (rotate) on (B, N, H, D)
    q = rope(q)
    k = rope(k)

    # (B, N, H, D) -> (B, H, N, D); XLA fuses this transpose with the RoPE
    # elementwise pass for q/k.
    # TODO(synk): fusing RoPE + this layout change into the attention kernel
    # would remove the remaining HBM passes; kept in JAX for lowering safety.
    def to_bhnd(t):
        return t.transpose(0, 2, 1, 3)

    sm_scale = 1.0 / math.sqrt(head_dim)
    o = pallas_causal_attention(to_bhnd(q), to_bhnd(k), to_bhnd(v),
                                sm_scale=sm_scale)

    # (B, H, N, D) -> (B*N, H*D)
    o = o.transpose(0, 2, 1, 3).reshape(b * n, num_heads * head_dim)
    out = pallas_linear(o, params["wo"]).reshape(b, n, e)
    return out


# ----------------------------------------------------------------------------
# Pure-JAX (f32) reference for validation
# ----------------------------------------------------------------------------
def reference_forward(x, params, *, num_heads, head_dim):
    b, n, e = x.shape
    q = (x @ params["wq"]).reshape(b, n, num_heads, head_dim)
    k = (x @ params["wk"]).reshape(b, n, num_heads, head_dim)
    v = (x @ params["wv"]).reshape(b, n, num_heads, head_dim)
    q, k = rope(q), rope(k)
    scale = 1.0 / math.sqrt(head_dim)
    s = jnp.einsum("bnhd,bmhd->bhnm", q, k) * scale
    causal = jnp.tril(jnp.ones((n, n), dtype=bool))
    s = jnp.where(causal[None, None], s, -jnp.inf)
    p = jax.nn.softmax(s, axis=-1)
    o = jnp.einsum("bhnm,bmhd->bnhd", p, v).reshape(b, n, num_heads * head_dim)
    return (o @ params["wo"]).reshape(b, n, e)


if __name__ == "__main__":
    # Small config consistent with the module: embed_dim=32, num_heads=4,
    # head_dim=8, kv_heads=-1 (kv_dim = embed_dim), bias=False, use_lrpe=True.
    B, N, E, H = 2, 256, 32, 4
    D = E // H
    key = jax.random.PRNGKey(0)
    kx, kq, kk, kv, kg, ko = jax.random.split(key, 6)

    x = jax.random.normal(kx, (B, N, E), dtype=jnp.float32)

    # Deterministic synthetic weights (stored as (in, out), i.e. torch W.T).
    # TODO(synk): exact _initialize_weights(token_mixer_init_type=4,
    # rescale_type=2) scheme from xmixers is not reproduced; N(0, 0.02) used.
    init_std = 0.02
    params = {
        "wq": init_std * jax.random.normal(kq, (E, H * D), dtype=jnp.float32),
        "wk": init_std * jax.random.normal(kk, (E, E), dtype=jnp.float32),
        "wv": init_std * jax.random.normal(kv, (E, E), dtype=jnp.float32),
        "wg": init_std * jax.random.normal(kg, (E, 3 * H), dtype=jnp.float32),
        "wo": init_std * jax.random.normal(ko, (H * D, E), dtype=jnp.float32),
    }

    out = naive_sparse_attention_forward(x, params, num_heads=H, head_dim=D)
    out = jax.block_until_ready(out)

    ref = reference_forward(x, params, num_heads=H, head_dim=D)
    assert out.shape == (B, N, E)
    # bf16 MXU inputs inside the attention kernel (matching flash_attn's
    # half-precision path) -> compare against the f32 reference with a
    # correspondingly relaxed tolerance.
    max_err = float(jnp.max(jnp.abs(out - ref)))
    assert jnp.allclose(out, ref, atol=2e-3, rtol=1e-2), max_err
    print("KERNEL_OK")
</pallas_src>

<mosaic_0001>
module attributes {stable_mosaic.version = 11 : i64} {
  func.func @_linear_kernel(%arg0: i32, %arg1: memref<256x32xf32, #tpu.memory_space<vmem>>, %arg2: memref<32x32xf32, #tpu.memory_space<vmem>>, %arg3: memref<256x32xf32, #tpu.memory_space<vmem>>) attributes {dimension_semantics = [#tpu.dimension_semantics<parallel>], iteration_bounds = array<i64: 2>, scalar_prefetch = 0 : i64, scratch_operands = 0 : i64, tpu.core_type = #tpu.core_type<tc>, window_params = [{transform_indices = @transform_0, window_bounds = array<i64: 256, 32>}, {pipeline_mode = #tpu.pipeline_mode<synchronous>, transform_indices = @transform_1, window_bounds = array<i64: 32, 32>}, {transform_indices = @transform_2, window_bounds = array<i64: 256, 32>}]} {
    %c0 = arith.constant 0 : index
    %c0_0 = arith.constant 0 : index
    %0 = vector.load %arg1[%c0, %c0_0] : memref<256x32xf32, #tpu.memory_space<vmem>>, vector<256x32xf32>
    %c0_1 = arith.constant 0 : index
    %c0_2 = arith.constant 0 : index
    %1 = vector.load %arg2[%c0_1, %c0_2] : memref<32x32xf32, #tpu.memory_space<vmem>>, vector<32x32xf32>
    %cst = arith.constant dense<0.000000e+00> : vector<256x32xf32>
    %2 = tpu.matmul %0, %1, %cst {dimension_numbers = #tpu.dot_dimension_numbers<[1], [0], [0], [1], [0, 0, 1, 1], [], []>} : vector<256x32xf32>, vector<32x32xf32>, vector<256x32xf32> -> vector<256x32xf32>
    %c0_3 = arith.constant 0 : index
    %c0_4 = arith.constant 0 : index
    %3 = vector.load %arg3[%c0_3, %c0_4] : memref<256x32xf32, #tpu.memory_space<vmem>>, vector<256x32xf32>
    tpu.vector_store %arg3[%c0_3, %c0_4], %2 {strides = array<i32>} : memref<256x32xf32, #tpu.memory_space<vmem>>, vector<256x32xf32>,
    return
  }
  func.func @transform_0(%arg0: i32) -> (i32, i32) {
    %c0_i32 = arith.constant 0 : i32
    %c0_i32_0 = arith.constant 0 : i32
    return %arg0, %c0_i32 : i32, i32
  }
  func.func @transform_1(%arg0: i32) -> (i32, i32) {
    %c0_i32 = arith.constant 0 : i32
    %c0_i32_0 = arith.constant 0 : i32
    %c0_i32_1 = arith.constant 0 : i32
    return %c0_i32, %c0_i32_0 : i32, i32
  }
  func.func @transform_2(%arg0: i32) -> (i32, i32) {
    %c0_i32 = arith.constant 0 : i32
    %c0_i32_0 = arith.constant 0 : i32
    return %arg0, %c0_i32 : i32, i32
  }
}

</mosaic_0001>

<llo_original>
// kernel: tpu_custom_call.1
$region0: #{tpu_custom_call.1}
  #allocation0 [shape = 'u32[]', space=smem, size = 0x4, offset = 0x4, fixed_abs, tag = 'smem constant byte address 0x4 - core index']
  #allocation1 [shape = 'u32[72,128]{1,0:T(1,128)}', space=vmem, size = 0x9000, scoped, tag = 'internal scratch']
  %s0 = inlined_call_operand.vmem [shape: f32[512,32], index: 0, kind: input, shape index: {}]
  %s1 = inlined_call_operand.vmem [shape: f32[32,32], index: 1, kind: input, shape index: {}]
  %s2 = inlined_call_operand.vmem [shape: f32[512,32], index: 2, kind: output, shape index: {}]
  %s3 = sld [smem:[#allocation0]]
  $region41: #{tpu_custom_call.1} parent=0
    _
  %s5 = ssub.s32 1, %s3
  %s6 = scalar_select 0, %s5, %s3
  loop: start=0, step=1, limit=4
  $region2: #{tpu_custom_call.1} parent=0 // loop_pre_header
    _
  $region3: #{tpu_custom_call.1} parent=0 // loop_header
    %s8 = sphi 0, %s12
    %p9 = scmp.ge.s32.totalorder %s8, 4
    %s18 = sphi 0, %s20
    %s21 = sphi 0, %s18
    %s22 = sphi 0, %s21
    %s38 = sphi 0, %s22
    %s42 = sphi 0, %s42
    %s44 = sphi 0, %s42
    %s45 = sphi 0, %s44
    %s59 = sphi 0, %s45
    %s65 = sphi 0, %s67
    %s68 = sphi 0, %s65
    %s69 = sphi 0, %s68
    %s85 = sphi 0, %s69
  $region4: #{tpu_custom_call.1} parent=0 // loop_header_branch
    %11 = sbr.rel (%p9) target = $region8
  $region5: #{tpu_custom_call.1} parent=0 // loop_body
    %s13 = ssub.s32 %s8, 1
    %s14 = ssub.s32 %s8, 2
    %s15 = sadd.s32 %s8, 1
    %s16 = ssub.s32 %s8, %s15
    %p17 = scmp.eq.s32.totalorder %s16, 0
    %s19 = sadd.s32 %s18, 1
    %s20 = scalar_select %p17, %s18, %s19
    %p23 = pneg %p17
    %p24 = scmp.eq.s32.totalorder %s8, 1
    %p25 = por %p23, %p24
    %p26 = scmp.ne.s32.totalorder %s18, %s21
    %p27 = scmp.eq.s32.totalorder %s8, 0
    %p28 = por %p26, %p27
    %p29 = scmp.ne.s32.totalorder %s18, %s21
    %p30 = scmp.eq.s32.totalorder %s13, 1
    %p31 = por %p29, %p30
    %p32 = scmp.ne.s32.totalorder %s21, %s22
    %p33 = scmp.eq.s32.totalorder %s13, 0
    %p34 = por %p32, %p33
    %p35 = scmp.ne.s32.totalorder %s21, %s22
    %p36 = scmp.eq.s32.totalorder %s14, 1
    %p37 = por %p35, %p36
    %p39 = scmp.ne.s32.totalorder %s22, %s38
    %p40 = scmp.eq.s32.totalorder %s14, 0
    %p41 = por %p39, %p40
    %s43 = sadd.s32 %s42, 1
    %p46 = scmp.eq.s32.totalorder %s8, 1
    %p47 = scmp.ne.s32.totalorder %s42, %s44
    %p48 = scmp.eq.s32.totalorder %s8, 0
    %p49 = por %p47, %p48
    %p50 = scmp.ne.s32.totalorder %s42, %s44
    %p51 = scmp.eq.s32.totalorder %s13, 1
    %p52 = por %p50, %p51
    %p53 = scmp.ne.s32.totalorder %s44, %s45
    %p54 = scmp.eq.s32.totalorder %s13, 0
    %p55 = por %p53, %p54
    %p56 = scmp.ne.s32.totalorder %s44, %s45
    %p57 = scmp.eq.s32.totalorder %s14, 1
    %p58 = por %p56, %p57
    %p60 = scmp.ne.s32.totalorder %s45, %s59
    %p61 = scmp.eq.s32.totalorder %s14, 0
    %p62 = por %p60, %p61
    %s63 = ssub.s32 %s8, %s15
    %p64 = scmp.eq.s32.totalorder %s63, 0
    %s66 = sadd.s32 %s65, 1
    %s67 = scalar_select %p64, %s65, %s66
    %p70 = pneg %p64
    %p71 = scmp.eq.s32.totalorder %s8, 1
    %p72 = por %p70, %p71
    %p73 = scmp.ne.s32.totalorder %s65, %s68
    %p74 = scmp.eq.s32.totalorder %s8, 0
    %p75 = por %p73, %p74
    %p76 = scmp.ne.s32.totalorder %s65, %s68
    %p77 = scmp.eq.s32.totalorder %s13, 1
    %p78 = por %p76, %p77
    %p79 = scmp.ne.s32.totalorder %s68, %s69
    %p80 = scmp.eq.s32.totalorder %s13, 0
    %p81 = por %p79, %p80
    %p82 = scmp.ne.s32.totalorder %s68, %s69
    %p83 = scmp.eq.s32.totalorder %s14, 1
    %p84 = por %p82, %p83
    %p86 = scmp.ne.s32.totalorder %s69, %s85
    %p87 = scmp.eq.s32.totalorder %s14, 0
    %p88 = por %p86, %p87
    %p89 = scmp.le.s32.totalorder 1, %s8
    %p90 = scmp.lt.s32.totalorder %s8, 3
    %p91 = pnand %p89, %p90
    %p92 = pneg %p91
    // Predicated region
    $region9: #{tpu_custom_call.1} parent=5 // pred_check
      _
    $region10: #{tpu_custom_call.1} parent=5 // pred_check_branch
      %94 = sbr.rel (%p91) target = $region12
    $region11: #{tpu_custom_call.1} parent=5 // pred_region
      %s95 = ssub.s32 %s8, 1
      // Predicated region
      $region13: #{tpu_custom_call.1} parent=11 // pred_check
        %p96 = pneg %p55
      $region14: #{tpu_custom_call.1} parent=11 // pred_check_branch
        %98 = sbr.rel (%p96) target = $region16
      $region15: #{tpu_custom_call.1} parent=11 // pred_region
        _
      $region16: #{tpu_custom_call.1} parent=11 // pred_fallthru
        _
    $region12: #{tpu_custom_call.1} parent=5 // pred_fallthru
      _
    %p99 = scmp.lt.s32.totalorder %s8, 2
    // Predicated region
    $region17: #{tpu_custom_call.1} parent=5 // pred_check
      %p100 = pneg %p99
    $region18: #{tpu_custom_call.1} parent=5 // pred_check_branch
      %102 = sbr.rel (%p100) target = $region20
    $region19: #{tpu_custom_call.1} parent=5 // pred_region
      // Predicated region
      $region21: #{tpu_custom_call.1} parent=19 // pred_check
        %p103 = pneg %p28
      $region22: #{tpu_custom_call.1} parent=19 // pred_check_branch
        %105 = sbr.rel (%p103) target = $region24
      $region23: #{tpu_custom_call.1} parent=19 // pred_region
        %s106 = smul.u32 32, %s8
        %p107 = scmp.lt.s32.totalorder %s106, 63
        %s108 = scalar_select %p107, %s106, 63
        %s109 = smul.addr %s108, 8
        %s110 = scalar_lea.vmem %s0, %s109
        %s111 = smul.u32 32, %s8
      $region24: #{tpu_custom_call.1} parent=19 // pred_fallthru
        _
    $region20: #{tpu_custom_call.1} parent=5 // pred_fallthru
      _
    %p112 = scmp.le.s32.totalorder 1, %s8
    %p113 = scmp.lt.s32.totalorder %s8, 3
    %p114 = pnand %p112, %p113
    %p115 = pneg %p114
    // Predicated region
    $region25: #{tpu_custom_call.1} parent=5 // pred_check
      _
    $region26: #{tpu_custom_call.1} parent=5 // pred_check_branch
      %117 = sbr.rel (%p114) target = $region28
    $region27: #{tpu_custom_call.1} parent=5 // pred_region
      %s118 = ssub.s32 %s8, 1
      %s119 = smul.u32 32, %s13
      %p120 = scmp.lt.s32.totalorder %s119, 63
      %s121 = scalar_select %p120, %s119, 63
      %s122 = smul.addr %s121, 8
      %s123 = scalar_lea.vmem %s0, %s122
      %p124 = pneg %p34
      %p125 = pneg %p31
      %p126 = pneg %p55
      %p127 = pneg %p52
      %p128 = pneg %p81
      %p129 = pneg %p78
      %s130 = smul.u32 32, %s13
      %p131 = scmp.lt.s32.totalorder %s130, 63
      %s132 = scalar_select %p131, %s130, 63
      %s133 = smul.addr %s132, 8
      %s134 = scalar_lea.vmem %s2, %s133
      %s135 = smul.u32 32, %s13
      %p136 = scmp.lt.s32.totalorder %s135, 63
      %s137 = scalar_select %p136, %s135, 63
      %s138 = smul.addr %s137, 8
      %s139 = scalar_lea.vmem %s0, %s138
      %s140 = smul.u32 32, %s13
      %s141 = smul.u32 32, %s13
      %p142 = scmp.lt.s32.totalorder %s141, 63
      %s143 = scalar_select %p142, %s141, 63
      %s144 = smul.addr %s143, 8
      %s145 = scalar_lea.vmem %s2, %s144
      %s146 = smul.u32 32, %s13
      %v147 = vld [vmem:[%s139] sm:$0xff]
      %v148 = vld [vmem:[%s139 + $0x8] sm:$0xff]
      %v149 = vld [vmem:[%s139 + $0x10] sm:$0xff]
      %v150 = vld [vmem:[%s139 + $0x18] sm:$0xff]
      %v151 = vld [vmem:[%s139 + $0x20] sm:$0xff]
      %v152 = vld [vmem:[%s139 + $0x28] sm:$0xff]
      %v153 = vld [vmem:[%s139 + $0x30] sm:$0xff]
      %v154 = vld [vmem:[%s139 + $0x38] sm:$0xff]
      %v155 = vld [vmem:[%s139 + $0x40] sm:$0xff]
      %v156 = vld [vmem:[%s139 + $0x48] sm:$0xff]
      %v157 = vld [vmem:[%s139 + $0x50] sm:$0xff]
      %v158 = vld [vmem:[%s139 + $0x58] sm:$0xff]
      %v159 = vld [vmem:[%s139 + $0x60] sm:$0xff]
      %v160 = vld [vmem:[%s139 + $0x68] sm:$0xff]
      %v161 = vld [vmem:[%s139 + $0x70] sm:$0xff]
      %v162 = vld [vmem:[%s139 + $0x78] sm:$0xff]
      %v163 = vld [vmem:[%s139 + $0x80] sm:$0xff]
      %v164 = vld [vmem:[%s139 + $0x88] sm:$0xff]
      %v165 = vld [vmem:[%s139 + $0x90] sm:$0xff]
      %v166 = vld [vmem:[%s139 + $0x98] sm:$0xff]
      %v167 = vld [vmem:[%s139 + $0xa0] sm:$0xff]
      %v168 = vld [vmem:[%s139 + $0xa8] sm:$0xff]
      %v169 = vld [vmem:[%s139 + $0xb0] sm:$0xff]
      %v170 = vld [vmem:[%s139 + $0xb8] sm:$0xff]
      %v171 = vld [vmem:[%s139 + $0xc0] sm:$0xff]
      %v172 = vld [vmem:[%s139 + $0xc8] sm:$0xff]
      %v173 = vld [vmem:[%s139 + $0xd0] sm:$0xff]
      %v174 = vld [vmem:[%s139 + $0xd8] sm:$0xff]
      %v175 = vld [vmem:[%s139 + $0xe0] sm:$0xff]
      %v176 = vld [vmem:[%s139 + $0xe8] sm:$0xff]
      %v177 = vld [vmem:[%s139 + $0xf0] sm:$0xff]
      %v178 = vld [vmem:[%s139 + $0xf8] sm:$0xff]
      %v179 = vld [vmem:[%s1] sm:$0xff]
      %v180 = vld [vmem:[%s1 + $0x8] sm:$0xff]
      %v181 = vld [vmem:[%s1 + $0x10] sm:$0xff]
      %v182 = vld [vmem:[%s1 + $0x18] sm:$0xff]
      %vm183 = vcmask 261120
      %v185 = vsel %vm183, %v147, 0
      %v188 = vsel %vm183, %v148, 0
      %v191 = vsel %vm183, %v149, 0
      %v194 = vsel %vm183, %v150, 0
      %v197 = vsel %vm183, %v151, 0
      %v200 = vsel %vm183, %v152, 0
      %v203 = vsel %vm183, %v153, 0
      %v206 = vsel %vm183, %v154, 0
      %v209 = vsel %vm183, %v155, 0
      %v212 = vsel %vm183, %v156, 0
      %v215 = vsel %vm183, %v157, 0
      %v218 = vsel %vm183, %v158, 0
      %v221 = vsel %vm183, %v159, 0
      %v224 = vsel %vm183, %v160, 0
      %v227 = vsel %vm183, %v161, 0
      %v230 = vsel %vm183, %v162, 0
      %v233 = vsel %vm183, %v163, 0
      %v236 = vsel %vm183, %v164, 0
      %v239 = vsel %vm183, %v165, 0
      %v242 = vsel %vm183, %v166, 0
      %v245 = vsel %vm183, %v167, 0
      %v248 = vsel %vm183, %v168, 0
      %v251 = vsel %vm183, %v169, 0
      %v254 = vsel %vm183, %v170, 0
      %v257 = vsel %vm183, %v171, 0
      %v260 = vsel %vm183, %v172, 0
      %v263 = vsel %vm183, %v173, 0
      %v266 = vsel %vm183, %v174, 0
      %v269 = vsel %vm183, %v175, 0
      %v272 = vsel %vm183, %v176, 0
      %v275 = vsel %vm183, %v177, 0
      %v278 = vsel %vm183, %v178, 0
      %280 = vmatpush.msra.mxu0 0.0
      %281 = vmatpush.msra.mxu0 0.0
      %282 = vmatpush.msra.mxu0 0.0
      %283 = vmatpush.msra.mxu0 0.0
      %284 = vmatpush.msra.mxu0 0.0
      %285 = vmatpush.msra.mxu0 0.0
      %286 = vmatpush.msra.mxu0 0.0
      %287 = vmatpush.msra.mxu0 0.0
      %288 = vmatpush.msra.mxu0 0.0
      %289 = vmatpush.msra.mxu0 0.0
      %290 = vmatpush.msra.mxu0 0.0
      %291 = vmatpush.msra.mxu0 0.0
      %292 = vmatpush.msra.mxu0 %v182
      %293 = vmatpush.msra.mxu0 %v181
      %294 = vmatpush.msra.mxu0 %v180
      %295 = vmatpush.msra.mxu0 %v179
      %296 = vmatmul.f32.gmra.mxu0 %v185
      %v297 = vpop.f32.mrf.mxu0
      %v298 = vadd.f32 0.0, %v297
      %299 = vmatmul.f32.gmra.mxu0 %v188
      %v300 = vpop.f32.mrf.mxu0
      %v301 = vadd.f32 0.0, %v300
      %302 = vmatmul.f32.gmra.mxu0 %v191
      %v303 = vpop.f32.mrf.mxu0
      %v304 = vadd.f32 0.0, %v303
      %305 = vmatmul.f32.gmra.mxu0 %v194
      %v306 = vpop.f32.mrf.mxu0
      %v307 = vadd.f32 0.0, %v306
      %308 = vmatmul.f32.gmra.mxu0 %v197
      %v309 = vpop.f32.mrf.mxu0
      %v310 = vadd.f32 0.0, %v309
      %311 = vmatmul.f32.gmra.mxu0 %v200
      %v312 = vpop.f32.mrf.mxu0
      %v313 = vadd.f32 0.0, %v312
      %314 = vmatmul.f32.gmra.mxu0 %v203
      %v315 = vpop.f32.mrf.mxu0
      %v316 = vadd.f32 0.0, %v315
      %317 = vmatmul.f32.gmra.mxu0 %v206
      %v318 = vpop.f32.mrf.mxu0
      %v319 = vadd.f32 0.0, %v318
      %320 = vmatmul.f32.gmra.mxu0 %v209
      %v321 = vpop.f32.mrf.mxu0
      %v322 = vadd.f32 0.0, %v321
      %323 = vmatmul.f32.gmra.mxu0 %v212
      %v324 = vpop.f32.mrf.mxu0
      %v325 = vadd.f32 0.0, %v324
      %326 = vmatmul.f32.gmra.mxu0 %v215
      %v327 = vpop.f32.mrf.mxu0
      %v328 = vadd.f32 0.0, %v327
      %329 = vmatmul.f32.gmra.mxu0 %v218
      %v330 = vpop.f32.mrf.mxu0
      %v331 = vadd.f32 0.0, %v330
      %332 = vmatmul.f32.gmra.mxu0 %v221
      %v333 = vpop.f32.mrf.mxu0
      %v334 = vadd.f32 0.0, %v333
      %335 = vmatmul.f32.gmra.mxu0 %v224
      %v336 = vpop.f32.mrf.mxu0
      %v337 = vadd.f32 0.0, %v336
      %338 = vmatmul.f32.gmra.mxu0 %v227
      %v339 = vpop.f32.mrf.mxu0
      %v340 = vadd.f32 0.0, %v339
      %341 = vmatmul.f32.gmra.mxu0 %v230
      %v342 = vpop.f32.mrf.mxu0
      %v343 = vadd.f32 0.0, %v342
      %344 = vmatmul.f32.gmra.mxu0 %v233
      %v345 = vpop.f32.mrf.mxu0
      %v346 = vadd.f32 0.0, %v345
      %347 = vmatmul.f32.gmra.mxu0 %v236
      %v348 = vpop.f32.mrf.mxu0
      %v349 = vadd.f32 0.0, %v348
      %350 = vmatmul.f32.gmra.mxu0 %v239
      %v351 = vpop.f32.mrf.mxu0
      %v352 = vadd.f32 0.0, %v351
      %353 = vmatmul.f32.gmra.mxu0 %v242
      %v354 = vpop.f32.mrf.mxu0
      %v355 = vadd.f32 0.0, %v354
      %356 = vmatmul.f32.gmra.mxu0 %v245
      %v357 = vpop.f32.mrf.mxu0
      %v358 = vadd.f32 0.0, %v357
      %359 = vmatmul.f32.gmra.mxu0 %v248
      %v360 = vpop.f32.mrf.mxu0
      %v361 = vadd.f32 0.0, %v360
      %362 = vmatmul.f32.gmra.mxu0 %v251
      %v363 = vpop.f32.mrf.mxu0
      %v364 = vadd.f32 0.0, %v363
      %365 = vmatmul.f32.gmra.mxu0 %v254
      %v366 = vpop.f32.mrf.mxu0
      %v367 = vadd.f32 0.0, %v366
      %368 = vmatmul.f32.gmra.mxu0 %v257
      %v369 = vpop.f32.mrf.mxu0
      %v370 = vadd.f32 0.0, %v369
      %371 = vmatmul.f32.gmra.mxu0 %v260
      %v372 = vpop.f32.mrf.mxu0
      %v373 = vadd.f32 0.0, %v372
      %374 = vmatmul.f32.gmra.mxu0 %v263
      %v375 = vpop.f32.mrf.mxu0
      %v376 = vadd.f32 0.0, %v375
      %377 = vmatmul.f32.gmra.mxu0 %v266
      %v378 = vpop.f32.mrf.mxu0
      %v379 = vadd.f32 0.0, %v378
      %380 = vmatmul.f32.gmra.mxu0 %v269
      %v381 = vpop.f32.mrf.mxu0
      %v382 = vadd.f32 0.0, %v381
      %383 = vmatmul.f32.gmra.mxu0 %v272
      %v384 = vpop.f32.mrf.mxu0
      %v385 = vadd.f32 0.0, %v384
      %386 = vmatmul.f32.gmra.mxu0 %v275
      %v387 = vpop.f32.mrf.mxu0
      %v388 = vadd.f32 0.0, %v387
      %389 = vmatmul.f32.gmra.mxu0 %v278
      %v390 = vpop.f32.mrf.mxu0
      %v391 = vadd.f32 0.0, %v390
      %392 = vdwg.mxu0
      %393 = vst.msk [vmem:[%s145] sm:$0xff] %vm183, %v298
      %394 = vst.msk [vmem:[%s145 + $0x8] sm:$0xff] %vm183, %v301
      %395 = vst.msk [vmem:[%s145 + $0x10] sm:$0xff] %vm183, %v304
      %396 = vst.msk [vmem:[%s145 + $0x18] sm:$0xff] %vm183, %v307
      %397 = vst.msk [vmem:[%s145 + $0x20] sm:$0xff] %vm183, %v310
      %398 = vst.msk [vmem:[%s145 + $0x28] sm:$0xff] %vm183, %v313
      %399 = vst.msk [vmem:[%s145 + $0x30] sm:$0xff] %vm183, %v316
      %400 = vst.msk [vmem:[%s145 + $0x38] sm:$0xff] %vm183, %v319
      %401 = vst.msk [vmem:[%s145 + $0x40] sm:$0xff] %vm183, %v322
      %402 = vst.msk [vmem:[%s145 + $0x48] sm:$0xff] %vm183, %v325
      %403 = vst.msk [vmem:[%s145 + $0x50] sm:$0xff] %vm183, %v328
      %404 = vst.msk [vmem:[%s145 + $0x58] sm:$0xff] %vm183, %v331
      %405 = vst.msk [vmem:[%s145 + $0x60] sm:$0xff] %vm183, %v334
      %406 = vst.msk [vmem:[%s145 + $0x68] sm:$0xff] %vm183, %v337
      %407 = vst.msk [vmem:[%s145 + $0x70] sm:$0xff] %vm183, %v340
      %408 = vst.msk [vmem:[%s145 + $0x78] sm:$0xff] %vm183, %v343
      %409 = vst.msk [vmem:[%s145 + $0x80] sm:$0xff] %vm183, %v346
      %410 = vst.msk [vmem:[%s145 + $0x88] sm:$0xff] %vm183, %v349
      %411 = vst.msk [vmem:[%s145 + $0x90] sm:$0xff] %vm183, %v352
      %412 = vst.msk [vmem:[%s145 + $0x98] sm:$0xff] %vm183, %v355
      %413 = vst.msk [vmem:[%s145 + $0xa0] sm:$0xff] %vm183, %v358
      %414 = vst.msk [vmem:[%s145 + $0xa8] sm:$0xff] %vm183, %v361
      %415 = vst.msk [vmem:[%s145 + $0xb0] sm:$0xff] %vm183, %v364
      %416 = vst.msk [vmem:[%s145 + $0xb8] sm:$0xff] %vm183, %v367
      %417 = vst.msk [vmem:[%s145 + $0xc0] sm:$0xff] %vm183, %v370
      %418 = vst.msk [vmem:[%s145 + $0xc8] sm:$0xff] %vm183, %v373
      %419 = vst.msk [vmem:[%s145 + $0xd0] sm:$0xff] %vm183, %v376
      %420 = vst.msk [vmem:[%s145 + $0xd8] sm:$0xff] %vm183, %v379
      %421 = vst.msk [vmem:[%s145 + $0xe0] sm:$0xff] %vm183, %v382
      %422 = vst.msk [vmem:[%s145 + $0xe8] sm:$0xff] %vm183, %v385
      %423 = vst.msk [vmem:[%s145 + $0xf0] sm:$0xff] %vm183, %v388
      %424 = vst.msk [vmem:[%s145 + $0xf8] sm:$0xff] %vm183, %v391
      %s425 = smul.u32 32, %s13
      %p426 = scmp.lt.s32.totalorder %s425, 63
      %s427 = scalar_select %p426, %s425, 63
      %s428 = smul.addr %s427, 8
      %s429 = scalar_lea.vmem %s2, %s428
      // Predicated region
      $region29: #{tpu_custom_call.1} parent=27 // pred_check
        %p430 = pneg %p78
      $region30: #{tpu_custom_call.1} parent=27 // pred_check_branch
        %432 = sbr.rel (%p430) target = $region32
      $region31: #{tpu_custom_call.1} parent=27 // pred_region
        %s433 = smul.u32 32, %s13
      $region32: #{tpu_custom_call.1} parent=27 // pred_fallthru
        _
    $region28: #{tpu_custom_call.1} parent=5 // pred_fallthru
      _
    %p434 = scmp.le.s32.totalorder 2, %s8
    // Predicated region
    $region33: #{tpu_custom_call.1} parent=5 // pred_check
      %p435 = pneg %p434
    $region34: #{tpu_custom_call.1} parent=5 // pred_check_branch
      %437 = sbr.rel (%p435) target = $region36
    $region35: #{tpu_custom_call.1} parent=5 // pred_region
      %s438 = ssub.s32 %s8, 2
      // Predicated region
      $region37: #{tpu_custom_call.1} parent=35 // pred_check
        %p439 = pneg %p84
      $region38: #{tpu_custom_call.1} parent=35 // pred_check_branch
        %441 = sbr.rel (%p439) target = $region40
      $region39: #{tpu_custom_call.1} parent=35 // pred_region
        %s442 = smul.u32 32, %s14
        %p443 = scmp.lt.s32.totalorder %s442, 63
        %s444 = scalar_select %p443, %s442, 63
        %s445 = smul.addr %s444, 8
        %s446 = scalar_lea.vmem %s2, %s445
      $region40: #{tpu_custom_call.1} parent=35 // pred_fallthru
        _
    $region36: #{tpu_custom_call.1} parent=5 // pred_fallthru
      _
  $region6: #{tpu_custom_call.1} parent=0 // loop_footer
    %s12 = sadd.s32 1, %s8
  $region7: #{tpu_custom_call.1} parent=0 // loop_footer_branch
    %7 = sbr.rel target = $region3
  $region8: #{tpu_custom_call.1} parent=0 // loop_exit
    _

</llo_original>
